<compile_context>
chip_gen: v5e
topology: v5e:2x2
jax: 0.10.0
libtpu: 0.0.40
codegen_flags: <defaults>
</compile_context>

<pallas_src>
import jax
import jax.numpy as jnp
from jax.experimental import pallas as pl
from jax.experimental.pallas import tpu as pltpu

ALPHA = 0.25
GAMMA = 2          # hard-coded below as two multiplies
LANES = 128
ROW_ALIGN = 32     # int8-friendly sublane tiling


def _focal_kernel(pred_ref, tgt_ref, out_ref):
    k = pl.program_id(1)     # reduction step within this partition

    @pl.when(k == 0)
    def _init():
        out_ref[...] = jnp.zeros_like(out_ref)

    logits = pred_ref[...].astype(jnp.float32)
    t = tgt_ref[...].astype(jnp.int32)   # int8 in HBM: 1=positive, 0=negative, -1=padding
    is_pos = t > 0
    valid = t >= 0

    # probs = sigmoid(x) for positives, 1 - sigmoid(x) == sigmoid(-x) for negatives:
    # one EUP pass, no separate (1 - p) select.
    z = jnp.where(is_pos, logits, -logits)
    probs = jnp.maximum(jax.nn.sigmoid(z), 1e-4)   # sigmoid <= 1 -> upper clamp redundant
    log_p = jnp.log(probs)
    a = jnp.where(is_pos, ALPHA, 1.0 - ALPHA)
    om = 1.0 - probs
    focal = -a * (om * om) * log_p                  # gamma == 2

    # Accumulate the lane-dense partial sum in the resident output block
    # (pure VPU adds; the cross-lane reduce is deferred to the wrapper epilogue).
    out_ref[...] += jnp.where(valid, focal, 0.0)


def focal_loss_multilabel(pred, target, *, tile_rows=2048, num_partitions=2):
    """pred, target: same shape (N, L). Returns scalar float32 focal loss
    (size_average=True, alpha=0.25, gamma=2)."""
    assert pred.shape == target.shape
    n_elems = 1
    for d in pred.shape:
        n_elems *= int(d)

    # Lane-dense layout: pad the flattened length to (num_partitions * tiles * tr) * 128.
    n_rows = pl.cdiv(n_elems, LANES)
    tr = pl.cdiv(min(tile_rows, pl.cdiv(n_rows, num_partitions)), ROW_ALIGN) * ROW_ALIGN
    tiles_per_part = pl.cdiv(n_rows, num_partitions * tr)
    total_rows = num_partitions * tiles_per_part * tr
    pad = total_rows * LANES - n_elems

    pred2d = jnp.pad(jnp.ravel(pred), (0, pad)).reshape(total_rows, LANES)
    tgt_i8 = (jnp.ravel(target) > 0.5).astype(jnp.int8)
    tgt2d = jnp.pad(tgt_i8, (0, pad), constant_values=-1).reshape(total_rows, LANES)

    partial = pl.pallas_call(
        _focal_kernel,
        out_shape=jax.ShapeDtypeStruct((num_partitions * tr, LANES), jnp.float32),
        grid_spec=pltpu.PrefetchScalarGridSpec(
            num_scalar_prefetch=0,
            grid=(num_partitions, tiles_per_part),
            in_specs=[
                pl.BlockSpec((tr, LANES), lambda i, k: (i * tiles_per_part + k, 0)),
                pl.BlockSpec((tr, LANES), lambda i, k: (i * tiles_per_part + k, 0)),
            ],
            out_specs=pl.BlockSpec((tr, LANES), lambda i, k: (i, 0)),
        ),
        compiler_params=pltpu.CompilerParams(
            dimension_semantics=("parallel", "arbitrary")),
    )(pred2d, tgt2d)

    # Single cheap cross-lane reduce + normalization (mean over all N*L elements).
    return jnp.sum(partial) / jnp.float32(n_elems)


def focal_loss_multilabel_ref(pred, target, alpha=ALPHA, gamma=GAMMA):
    """Pure-JAX reference matching the PyTorch module exactly (size_average=True)."""
    p = jax.nn.sigmoid(pred.astype(jnp.float32))
    t = target.astype(jnp.float32)
    probs = jnp.where(t > 0.5, p, 1.0 - p)
    probs = jnp.clip(probs, 0.0001, 1.0)
    a = jnp.where(t > 0.5, alpha, 1.0 - alpha)
    batch_loss = -a * (1.0 - probs) ** gamma * jnp.log(probs)
    per_label = jnp.mean(batch_loss, axis=0)   # mean over N for each label
    return jnp.mean(per_label)                 # mean over labels


if __name__ == "__main__":
    key = jax.random.PRNGKey(0)
    k1, k2 = jax.random.split(key)

    N, L = 8, 4  # batch=8, num_labels=4
    pred = jax.random.normal(k1, (N, L), dtype=jnp.float32) * 2.0
    target = (jax.random.uniform(k2, (N, L)) > 0.5).astype(jnp.float32)

    loss = focal_loss_multilabel(pred, target)
    jax.block_until_ready(loss)

    ref = focal_loss_multilabel_ref(pred, target)
    assert jnp.allclose(loss, ref, rtol=1e-5, atol=1e-6), (loss, ref)

    print("KERNEL_OK")
</pallas_src>

<mosaic_0001>
module attributes {stable_mosaic.version = 11 : i64} {
  func.func @_focal_kernel(%arg0: i32, %arg1: i32, %arg2: memref<32x128xf32, #tpu.memory_space<vmem>>, %arg3: memref<32x128xi8, #tpu.memory_space<vmem>>, %arg4: memref<32x128xf32, #tpu.memory_space<vmem>>) attributes {dimension_semantics = [#tpu.dimension_semantics<parallel>, #tpu.dimension_semantics<arbitrary>], iteration_bounds = array<i64: 2, 1>, scalar_prefetch = 0 : i64, scratch_operands = 0 : i64, tpu.core_type = #tpu.core_type<tc>, window_params = [{transform_indices = @transform_0, window_bounds = array<i64: 32, 128>}, {transform_indices = @transform_1, window_bounds = array<i64: 32, 128>}, {transform_indices = @transform_2, window_bounds = array<i64: 32, 128>}]} {
    %c0_i32 = arith.constant 0 : i32
    %0 = arith.cmpi eq, %arg1, %c0_i32 : i32
    %1 = arith.extui %0 : i1 to i32
    %c0_i32_0 = arith.constant 0 : i32
    %2 = arith.cmpi ne, %1, %c0_i32_0 : i32
    scf.if %2 {
      %cst_17 = arith.constant 0.000000e+00 : f32
      %36 = vector.broadcast %cst_17 : f32 to vector<32x128xf32>
      %c0_18 = arith.constant 0 : index
      %c0_19 = arith.constant 0 : index
      %37 = vector.load %arg4[%c0_18, %c0_19] : memref<32x128xf32, #tpu.memory_space<vmem>>, vector<32x128xf32>
      tpu.vector_store %arg4[%c0_18, %c0_19], %36 {strides = array<i32>} : memref<32x128xf32, #tpu.memory_space<vmem>>, vector<32x128xf32>,
    } else {
    }
    %c0 = arith.constant 0 : index
    %c0_1 = arith.constant 0 : index
    %3 = vector.load %arg2[%c0, %c0_1] : memref<32x128xf32, #tpu.memory_space<vmem>>, vector<32x128xf32>
    %c0_2 = arith.constant 0 : index
    %c0_3 = arith.constant 0 : index
    %4 = vector.load %arg3[%c0_2, %c0_3] : memref<32x128xi8, #tpu.memory_space<vmem>>, vector<32x128xi8>
    %5 = arith.extsi %4 : vector<32x128xi8> to vector<32x128xi32>
    %c0_i32_4 = arith.constant 0 : i32
    %6 = vector.broadcast %c0_i32_4 : i32 to vector<32x128xi32>
    %7 = arith.cmpi sgt, %5, %6 : vector<32x128xi32>
    %c0_i32_5 = arith.constant 0 : i32
    %8 = vector.broadcast %c0_i32_5 : i32 to vector<32x128xi32>
    %9 = arith.cmpi sge, %5, %8 : vector<32x128xi32>
    %cst = arith.constant 0.000000e+00 : f32
    %10 = vector.broadcast %cst : f32 to vector<32x128xf32>
    %11 = arith.subf %10, %3 : vector<32x128xf32>
    %12 = arith.select %7, %3, %11 : vector<32x128xi1>, vector<32x128xf32>
    %13 = arith.negf %12 : vector<32x128xf32>
    %14 = math.exp %13 : vector<32x128xf32>
    %cst_6 = arith.constant 1.000000e+00 : f32
    %15 = vector.broadcast %cst_6 : f32 to vector<32x128xf32>
    %16 = arith.addf %15, %14 : vector<32x128xf32>
    %17 = arith.divf %15, %16 : vector<32x128xf32>
    %cst_7 = arith.constant 9.99999974E-5 : f32
    %18 = vector.broadcast %cst_7 : f32 to vector<32x128xf32>
    %19 = arith.maximumf %17, %18 : vector<32x128xf32>
    %20 = math.log %19 : vector<32x128xf32>
    %cst_8 = arith.constant 2.500000e-01 : f32
    %cst_9 = arith.constant 7.500000e-01 : f32
    %21 = vector.broadcast %cst_8 : f32 to vector<32x128xf32>
    %22 = vector.broadcast %cst_9 : f32 to vector<32x128xf32>
    %23 = arith.select %7, %21, %22 : vector<32x128xi1>, vector<32x128xf32>
    %cst_10 = arith.constant 1.000000e+00 : f32
    %24 = vector.broadcast %cst_10 : f32 to vector<32x128xf32>
    %25 = arith.subf %24, %19 : vector<32x128xf32>
    %cst_11 = arith.constant 0.000000e+00 : f32
    %26 = vector.broadcast %cst_11 : f32 to vector<32x128xf32>
    %27 = arith.subf %26, %23 : vector<32x128xf32>
    %28 = arith.mulf %25, %25 : vector<32x128xf32>
    %29 = arith.mulf %27, %28 : vector<32x128xf32>
    %30 = arith.mulf %29, %20 : vector<32x128xf32>
    %c0_12 = arith.constant 0 : index
    %c0_13 = arith.constant 0 : index
    %31 = vector.load %arg4[%c0_12, %c0_13] : memref<32x128xf32, #tpu.memory_space<vmem>>, vector<32x128xf32>
    %cst_14 = arith.constant 0.000000e+00 : f32
    %32 = vector.broadcast %cst_14 : f32 to vector<32x128xf32>
    %33 = arith.select %9, %30, %32 : vector<32x128xi1>, vector<32x128xf32>
    %34 = arith.addf %31, %33 : vector<32x128xf32>
    %c0_15 = arith.constant 0 : index
    %c0_16 = arith.constant 0 : index
    %35 = vector.load %arg4[%c0_15, %c0_16] : memref<32x128xf32, #tpu.memory_space<vmem>>, vector<32x128xf32>
    tpu.vector_store %arg4[%c0_15, %c0_16], %34 {strides = array<i32>} : memref<32x128xf32, #tpu.memory_space<vmem>>, vector<32x128xf32>,
    return
  }
  func.func @transform_0(%arg0: i32, %arg1: i32) -> (i32, i32) {
    %c1_i32 = arith.constant 1 : i32
    %0 = arith.muli %arg0, %c1_i32 : i32
    %1 = arith.addi %0, %arg1 : i32
    %c0_i32 = arith.constant 0 : i32
    %c0_i32_0 = arith.constant 0 : i32
    return %1, %c0_i32 : i32, i32
  }
  func.func @transform_1(%arg0: i32, %arg1: i32) -> (i32, i32) {
    %c1_i32 = arith.constant 1 : i32
    %0 = arith.muli %arg0, %c1_i32 : i32
    %1 = arith.addi %0, %arg1 : i32
    %c0_i32 = arith.constant 0 : i32
    %c0_i32_0 = arith.constant 0 : i32
    return %1, %c0_i32 : i32, i32
  }
  func.func @transform_2(%arg0: i32, %arg1: i32) -> (i32, i32) {
    %c0_i32 = arith.constant 0 : i32
    %c0_i32_0 = arith.constant 0 : i32
    return %arg0, %c0_i32 : i32, i32
  }
}

</mosaic_0001>

<llo_original>
// kernel: tpu_custom_call.1
$region0: #{tpu_custom_call.1}
  #allocation0 [shape = 'u32[]', space=smem, size = 0x4, offset = 0x4, fixed_abs, tag = 'smem constant byte address 0x4 - core index']
  #allocation1 [shape = 'u32[72,128]{1,0:T(1,128)}', space=vmem, size = 0x9000, scoped, tag = 'internal scratch']
  %s0 = inlined_call_operand.hbm [shape: f32[64,128], index: 0, kind: input, shape index: {}]
  %s1 = inlined_call_operand.hbm [shape: s8[64,128], index: 1, kind: input, shape index: {}]
  %s2 = inlined_call_operand.hbm [shape: f32[64,128], index: 2, kind: output, shape index: {}]
  %s3 = sld [smem:[#allocation0]]
  $region53: #{tpu_custom_call.1} parent=0
    _
  %s5 = ssub.s32 1, %s3
  %s6 = scalar_select 0, %s5, %s3
  $region1: #{tpu_custom_call.1} parent=0
    #allocation2 [shape = 'u8[32768]{0}', space=vmem, size = 0x8000, scoped, tag = 'input window, operand 0']
    #allocation3 [shape = 's32[2]{0}', space=sflag, size = 0x8, scoped, tag = 'scoped memory for tpu_custom_call.1']
    #allocation4 [shape = 's32[2]{0}', space=sflag, size = 0x8, scoped, tag = 'scoped memory for tpu_custom_call.1']
    #allocation5 [shape = 'u8[8192]{0}', space=vmem, size = 0x2000, scoped, tag = 'input window, operand 1']
    #allocation6 [shape = 's32[2]{0}', space=sflag, size = 0x8, scoped, tag = 'scoped memory for tpu_custom_call.1']
    #allocation7 [shape = 'u8[32768]{0}', space=vmem, size = 0x8000, scoped, tag = 'output window, operand 0']
    %7 = vsyncpa [#allocation3], 0
    %s8 = scalar_lea.sflag [#allocation3], 1
    %9 = vsyncpa %s8, 0
    %10 = vsyncpa [#allocation6], 0
    %s11 = scalar_lea.sflag [#allocation6], 1
    %12 = vsyncpa %s11, 0
    %13 = vsyncpa [#allocation4], 0
    %s14 = scalar_lea.sflag [#allocation4], 1
    %15 = vsyncpa %s14, 0
    loop: start=0, step=1, limit=4
    $region2: #{tpu_custom_call.1} parent=1 // loop_pre_header
      _
    $region3: #{tpu_custom_call.1} parent=1 // loop_header
      %s17 = sphi 0, %s21
      %p18 = scmp.ge.s32.totalorder %s17, 4
      %s24 = sphi 0, %s36
      %s25 = sphi 0, %s32
      %s26 = sphi 0, %s24
      %s27 = sphi 0, %s25
      %s28 = sphi 0, %s26
      %s29 = sphi 0, %s27
      %s41 = sphi 0, %s43
      %s44 = sphi 0, %s41
      %s45 = sphi 0, %s44
      %s61 = sphi 0, %s45
      %s69 = sphi 0, %s71
      %s72 = sphi 0, %s69
      %s73 = sphi 0, %s72
      %s89 = sphi 0, %s73
      %s95 = sphi 0, %s97
      %s98 = sphi 0, %s95
      %s99 = sphi 0, %s98
      %s115 = sphi 0, %s99
    $region4: #{tpu_custom_call.1} parent=1 // loop_header_branch
      %20 = sbr.rel (%p18) target = $region8
    $region5: #{tpu_custom_call.1} parent=1 // loop_body
      %s22 = ssub.s32 %s17, 1
      %s23 = ssub.s32 %s17, 2
      %s30 = sadd.s32 1, %s25
      %p31 = scmp.ge.s32.totalorder %s30, 1
      %s32 = scalar_select %p31, 0, %s30
      %s33 = sadd.s32 1, %s24
      %s34 = scalar_select %p31, %s33, %s24
      %p35 = scmp.ge.s32.totalorder %s34, 2
      %s36 = scalar_select %p35, 0, %s34
      %s37 = sadd.s32 %s24, %s25
      %s38 = sadd.s32 %s36, %s32
      %s39 = ssub.s32 %s37, %s38
      %p40 = scmp.eq.s32.totalorder %s39, 0
      %s42 = sadd.s32 %s41, 1
      %s43 = scalar_select %p40, %s41, %s42
      %p46 = pneg %p40
      %p47 = scmp.eq.s32.totalorder %s17, 1
      %p48 = por %p46, %p47
      %p49 = scmp.ne.s32.totalorder %s41, %s44
      %p50 = scmp.eq.s32.totalorder %s17, 0
      %p51 = por %p49, %p50
      %p52 = scmp.ne.s32.totalorder %s41, %s44
      %p53 = scmp.eq.s32.totalorder %s22, 1
      %p54 = por %p52, %p53
      %p55 = scmp.ne.s32.totalorder %s44, %s45
      %p56 = scmp.eq.s32.totalorder %s22, 0
      %p57 = por %p55, %p56
      %p58 = scmp.ne.s32.totalorder %s44, %s45
      %p59 = scmp.eq.s32.totalorder %s23, 1
      %p60 = por %p58, %p59
      %p62 = scmp.ne.s32.totalorder %s45, %s61
      %p63 = scmp.eq.s32.totalorder %s23, 0
      %p64 = por %p62, %p63
      %s65 = sadd.s32 %s24, %s25
      %s66 = sadd.s32 %s36, %s32
      %s67 = ssub.s32 %s65, %s66
      %p68 = scmp.eq.s32.totalorder %s67, 0
      %s70 = sadd.s32 %s69, 1
      %s71 = scalar_select %p68, %s69, %s70
      %p74 = pneg %p68
      %p75 = scmp.eq.s32.totalorder %s17, 1
      %p76 = por %p74, %p75
      %p77 = scmp.ne.s32.totalorder %s69, %s72
      %p78 = scmp.eq.s32.totalorder %s17, 0
      %p79 = por %p77, %p78
      %p80 = scmp.ne.s32.totalorder %s69, %s72
      %p81 = scmp.eq.s32.totalorder %s22, 1
      %p82 = por %p80, %p81
      %p83 = scmp.ne.s32.totalorder %s72, %s73
      %p84 = scmp.eq.s32.totalorder %s22, 0
      %p85 = por %p83, %p84
      %p86 = scmp.ne.s32.totalorder %s72, %s73
      %p87 = scmp.eq.s32.totalorder %s23, 1
      %p88 = por %p86, %p87
      %p90 = scmp.ne.s32.totalorder %s73, %s89
      %p91 = scmp.eq.s32.totalorder %s23, 0
      %p92 = por %p90, %p91
      %s93 = ssub.s32 %s24, %s36
      %p94 = scmp.eq.s32.totalorder %s93, 0
      %s96 = sadd.s32 %s95, 1
      %s97 = scalar_select %p94, %s95, %s96
      %p100 = pneg %p94
      %p101 = scmp.eq.s32.totalorder %s17, 1
      %p102 = por %p100, %p101
      %p103 = scmp.ne.s32.totalorder %s95, %s98
      %p104 = scmp.eq.s32.totalorder %s17, 0
      %p105 = por %p103, %p104
      %p106 = scmp.ne.s32.totalorder %s95, %s98
      %p107 = scmp.eq.s32.totalorder %s22, 1
      %p108 = por %p106, %p107
      %p109 = scmp.ne.s32.totalorder %s98, %s99
      %p110 = scmp.eq.s32.totalorder %s22, 0
      %p111 = por %p109, %p110
      %p112 = scmp.ne.s32.totalorder %s98, %s99
      %p113 = scmp.eq.s32.totalorder %s23, 1
      %p114 = por %p112, %p113
      %p116 = scmp.ne.s32.totalorder %s99, %s115
      %p117 = scmp.eq.s32.totalorder %s23, 0
      %p118 = por %p116, %p117
      %p119 = scmp.le.s32.totalorder 1, %s17
      %p120 = scmp.lt.s32.totalorder %s17, 3
      %p121 = pnand %p119, %p120
      %p122 = pneg %p121
      // Predicated region
      $region9: #{tpu_custom_call.1} parent=5 // pred_check
        _
      $region10: #{tpu_custom_call.1} parent=5 // pred_check_branch
        %124 = sbr.rel (%p121) target = $region12
      $region11: #{tpu_custom_call.1} parent=5 // pred_region
        %s125 = ssub.s32 %s17, 1
      $region12: #{tpu_custom_call.1} parent=5 // pred_fallthru
        _
      %p126 = scmp.lt.s32.totalorder %s17, 2
      // Predicated region
      $region13: #{tpu_custom_call.1} parent=5 // pred_check
        %p127 = pneg %p126
      $region14: #{tpu_custom_call.1} parent=5 // pred_check_branch
        %129 = sbr.rel (%p127) target = $region16
      $region15: #{tpu_custom_call.1} parent=5 // pred_region
        // Predicated region
        $region17: #{tpu_custom_call.1} parent=15 // pred_check
          %p130 = pneg %p51
        $region18: #{tpu_custom_call.1} parent=15 // pred_check_branch
          %132 = sbr.rel (%p130) target = $region20
        $region19: #{tpu_custom_call.1} parent=15 // pred_region
          %s133 = sand.u32 %s41, 1
          %s134 = scalar_lea.sflag [#allocation3], %s133
          %s135 = sand.u32 %s41, 1
          %s136 = smul.addr %s135, 32
          %s137 = scalar_lea.vmem [#allocation2], %s136
          %s138 = sadd.s32 %s24, %s25
          %s139 = smul.u32 4, %s138
          %141 = vsyncadd %s134, 0
          %s142 = smul.addr %s139, 8
          %s143 = scalar_lea.hbm %s0, %s142
          %s144 = sshll.u32 %s143, 4
          %s145 = int_to_ptr.hbm [resolvable:$true] %s144
          %s146 = sshll.u32 %s137, 4
          %s147 = int_to_ptr.vmem [resolvable:$true] %s146
          %152 = dma.hbm_to_vmem [thread:$0]  %s145, 512, %s147, %s134, 128, 128, 8
        $region20: #{tpu_custom_call.1} parent=15 // pred_fallthru
          _
        // Predicated region
        $region21: #{tpu_custom_call.1} parent=15 // pred_check
          %p153 = pneg %p79
        $region22: #{tpu_custom_call.1} parent=15 // pred_check_branch
          %155 = sbr.rel (%p153) target = $region24
        $region23: #{tpu_custom_call.1} parent=15 // pred_region
          %s156 = sand.u32 %s69, 1
          %s157 = scalar_lea.sflag [#allocation6], %s156
          %s158 = sand.u32 %s69, 1
          %s159 = smul.addr %s158, 8
          %s160 = scalar_lea.vmem [#allocation5], %s159
          %s161 = sadd.s32 %s24, %s25
          %163 = vsyncadd %s157, 0
          %s164 = smul.addr %s161, 8
          %s165 = scalar_lea.hbm %s1, %s164
          %s167 = sshll.u32 %s165, 4
          %s168 = int_to_ptr.hbm [resolvable:$true] %s167
          %s169 = sshll.u32 %s160, 4
          %s170 = int_to_ptr.vmem [resolvable:$true] %s169
          %172 = dma.hbm_to_vmem [thread:$0]  %s168, 128, %s170, %s157
        $region24: #{tpu_custom_call.1} parent=15 // pred_fallthru
          _
      $region16: #{tpu_custom_call.1} parent=5 // pred_fallthru
        _
      %p173 = scmp.le.s32.totalorder 1, %s17
      %p174 = scmp.lt.s32.totalorder %s17, 3
      %p175 = pnand %p173, %p174
      %p176 = pneg %p175
      // Predicated region
      $region25: #{tpu_custom_call.1} parent=5 // pred_check
        _
      $region26: #{tpu_custom_call.1} parent=5 // pred_check_branch
        %178 = sbr.rel (%p175) target = $region28
      $region27: #{tpu_custom_call.1} parent=5 // pred_region
        %s179 = ssub.s32 %s17, 1
        %s180 = sand.u32 %s44, 1
        %s181 = scalar_lea.sflag [#allocation3], %s180
        %s182 = sand.u32 %s44, 1
        %s183 = smul.addr %s182, 32
        %s184 = scalar_lea.vmem [#allocation2], %s183
        // Predicated region
        $region29: #{tpu_custom_call.1} parent=27 // pred_check
          %p185 = pneg %p57
        $region30: #{tpu_custom_call.1} parent=27 // pred_check_branch
          %187 = sbr.rel (%p185) target = $region32
        $region31: #{tpu_custom_call.1} parent=27 // pred_region
          %189 = dma.done %s181, 512
        $region32: #{tpu_custom_call.1} parent=27 // pred_fallthru
          _
        %s190 = sand.u32 %s72, 1
        %s191 = scalar_lea.sflag [#allocation6], %s190
        %s192 = sand.u32 %s72, 1
        %s193 = smul.addr %s192, 8
        %s194 = scalar_lea.vmem [#allocation5], %s193
        // Predicated region
        $region33: #{tpu_custom_call.1} parent=27 // pred_check
          %p195 = pneg %p85
        $region34: #{tpu_custom_call.1} parent=27 // pred_check_branch
          %197 = sbr.rel (%p195) target = $region36
        $region35: #{tpu_custom_call.1} parent=27 // pred_region
          %199 = dma.done %s191, 128
        $region36: #{tpu_custom_call.1} parent=27 // pred_fallthru
          _
        %s200 = sand.u32 %s44, 1
        %s201 = scalar_lea.sflag [#allocation3], %s200
        %s202 = sand.u32 %s44, 1
        %s203 = smul.addr %s202, 32
        %s204 = scalar_lea.vmem [#allocation2], %s203
        %p205 = pneg %p57
        %p206 = pneg %p54
        %s207 = sand.u32 %s72, 1
        %s208 = scalar_lea.sflag [#allocation6], %s207
        %s209 = sand.u32 %s72, 1
        %s210 = smul.addr %s209, 8
        %s211 = scalar_lea.vmem [#allocation5], %s210
        %p212 = pneg %p85
        %p213 = pneg %p82
        %p214 = pneg %p111
        %p215 = pneg %p108
        %s216 = sand.u32 %s98, 1
        %s217 = scalar_lea.sflag [#allocation4], %s216
        %s218 = sand.u32 %s98, 1
        %s219 = smul.addr %s218, 32
        %s220 = scalar_lea.vmem [#allocation7], %s219
        %s221 = sadd.s32 %s26, %s27
        %s222 = smul.u32 4, %s221
        %s223 = sadd.s32 %s26, %s27
        %s224 = smul.u32 4, %s26
        %p225 = scmp.eq.s32.totalorder %s27, 0
        // Predicated region
        $region37: #{tpu_custom_call.1} parent=27 // pred_check
          %p226 = pneg %p225
        $region38: #{tpu_custom_call.1} parent=27 // pred_check_branch
          %228 = sbr.rel (%p226) target = $region40
        $region39: #{tpu_custom_call.1} parent=27 // pred_region
          %229 = vst [vmem:[%s220] sm:$0xff] 0.0
          %230 = vst [vmem:[%s220 + $0x8] sm:$0xff] 0.0
          %231 = vst [vmem:[%s220 + $0x10] sm:$0xff] 0.0
          %232 = vst [vmem:[%s220 + $0x18] sm:$0xff] 0.0
        $region40: #{tpu_custom_call.1} parent=27 // pred_fallthru
          _
        %v233 = vld [vmem:[%s184] sm:$0xff]
        %v234 = vld [vmem:[%s184 + $0x8] sm:$0xff]
        %v235 = vld [vmem:[%s184 + $0x10] sm:$0xff]
        %v236 = vld [vmem:[%s184 + $0x18] sm:$0xff]
        %v237 = vld [vmem:[%s194] sm:$0xff]
        %v238 = vunpack.c.0.s8 %v237
        %v239 = vunpack.c.1.s8 %v237
        %v240 = vunpack.c.2.s8 %v237
        %v241 = vunpack.c.3.s8 %v237
        %vm242 = vcmp.gt.s32.totalorder %v238, 0
        %vm243 = vcmp.gt.s32.totalorder %v239, 0
        %vm244 = vcmp.gt.s32.totalorder %v240, 0
        %vm245 = vcmp.gt.s32.totalorder %v241, 0
        %vm246 = vcmp.ge.s32.totalorder %v238, 0
        %vm247 = vcmp.ge.s32.totalorder %v239, 0
        %vm248 = vcmp.ge.s32.totalorder %v240, 0
        %vm249 = vcmp.ge.s32.totalorder %v241, 0
        %v250 = vsub.f32 0.0, %v233
        %v251 = vsub.f32 0.0, %v234
        %v252 = vsub.f32 0.0, %v235
        %v253 = vsub.f32 0.0, %v236
        %v254 = vsel %vm242, %v233, %v250
        %v255 = vsel %vm243, %v234, %v251
        %v256 = vsel %vm244, %v235, %v252
        %v257 = vsel %vm245, %v236, %v253
        %v258 = vxor.u32 %v254, 2147483648
        %v259 = vxor.u32 %v255, 2147483648
        %v260 = vxor.u32 %v256, 2147483648
        %v261 = vxor.u32 %v257, 2147483648
        %v262 = vmul.f32 %v258, 1.442695
        %v263 = vpow.pop %v262
        %v264 = vmul.f32 %v259, 1.442695
        %v265 = vpow.pop %v264
        %v266 = vmul.f32 %v260, 1.442695
        %v267 = vpow.pop %v266
        %v268 = vmul.f32 %v261, 1.442695
        %v269 = vpow.pop %v268
        %v270 = vadd.f32 %v263, 1.0
        %v271 = vadd.f32 %v265, 1.0
        %v272 = vadd.f32 %v267, 1.0
        %v273 = vadd.f32 %v269, 1.0
        %v274 = vrcp.pop %v270
        %v275 = vmul.f32 %v270, %v274
        %v276 = vsub.f32 1.0, %v275
        %v277 = vmul.f32 %v274, %v276
        %v278 = vadd.f32 %v274, %v277
        %vm279 = vweird.f32 %v270
        %vm280 = vweird.f32 %v274
        %vm281 = vmor %vm279, %vm280
        %v282 = vsel %vm281, %v274, %v278
        %v283 = vand.u32 2147483647, %v270
        %vm284 = vcmp.eq.f32.partialorder %v283, 8.507059e+37
        %v285 = vand.u32 %v270, 2147483648
        %v286 = vor.u32 1.1754944e-38, %v285
        %v287 = vsel %vm284, %v286, %v282
        %v288 = vmul.f32 1.0, %v287
        %v289 = vrcp.pop %v271
        %v290 = vmul.f32 %v271, %v289
        %v291 = vsub.f32 1.0, %v290
        %v292 = vmul.f32 %v289, %v291
        %v293 = vadd.f32 %v289, %v292
        %vm294 = vweird.f32 %v271
        %vm295 = vweird.f32 %v289
        %vm296 = vmor %vm294, %vm295
        %v297 = vsel %vm296, %v289, %v293
        %v298 = vand.u32 2147483647, %v271
        %vm299 = vcmp.eq.f32.partialorder %v298, 8.507059e+37
        %v300 = vand.u32 %v271, 2147483648
        %v301 = vor.u32 1.1754944e-38, %v300
        %v302 = vsel %vm299, %v301, %v297
        %v303 = vmul.f32 1.0, %v302
        %v304 = vrcp.pop %v272
        %v305 = vmul.f32 %v272, %v304
        %v306 = vsub.f32 1.0, %v305
        %v307 = vmul.f32 %v304, %v306
        %v308 = vadd.f32 %v304, %v307
        %vm309 = vweird.f32 %v272
        %vm310 = vweird.f32 %v304
        %vm311 = vmor %vm309, %vm310
        %v312 = vsel %vm311, %v304, %v308
        %v313 = vand.u32 2147483647, %v272
        %vm314 = vcmp.eq.f32.partialorder %v313, 8.507059e+37
        %v315 = vand.u32 %v272, 2147483648
        %v316 = vor.u32 1.1754944e-38, %v315
        %v317 = vsel %vm314, %v316, %v312
        %v318 = vmul.f32 1.0, %v317
        %v319 = vrcp.pop %v273
        %v320 = vmul.f32 %v273, %v319
        %v321 = vsub.f32 1.0, %v320
        %v322 = vmul.f32 %v319, %v321
        %v323 = vadd.f32 %v319, %v322
        %vm324 = vweird.f32 %v273
        %vm325 = vweird.f32 %v319
        %vm326 = vmor %vm324, %vm325
        %v327 = vsel %vm326, %v319, %v323
        %v328 = vand.u32 2147483647, %v273
        %vm329 = vcmp.eq.f32.partialorder %v328, 8.507059e+37
        %v330 = vand.u32 %v273, 2147483648
        %v331 = vor.u32 1.1754944e-38, %v330
        %v332 = vsel %vm329, %v331, %v327
        %v333 = vmul.f32 1.0, %v332
        %v334 = vmax.f32 %v288, 0.0001
        %v335 = vmax.f32 %v303, 0.0001
        %v336 = vmax.f32 %v318, 0.0001
        %v337 = vmax.f32 %v333, 0.0001
        %v338 = vlog2.pop %v334
        %v339 = vmul.f32 %v338, 0.6931472
        %v340 = vlog2.pop %v335
        %v341 = vmul.f32 %v340, 0.6931472
        %v342 = vlog2.pop %v336
        %v343 = vmul.f32 %v342, 0.6931472
        %v344 = vlog2.pop %v337
        %v345 = vmul.f32 %v344, 0.6931472
        %v346 = vsel %vm242, 0.25, 0.75
        %v347 = vsel %vm243, 0.25, 0.75
        %v348 = vsel %vm244, 0.25, 0.75
        %v349 = vsel %vm245, 0.25, 0.75
        %v350 = vsub.f32 1.0, %v334
        %v351 = vsub.f32 1.0, %v335
        %v352 = vsub.f32 1.0, %v336
        %v353 = vsub.f32 1.0, %v337
        %v354 = vsub.f32 0.0, %v346
        %v355 = vsub.f32 0.0, %v347
        %v356 = vsub.f32 0.0, %v348
        %v357 = vsub.f32 0.0, %v349
        %v358 = vmul.f32 %v350, %v350
        %v359 = vmul.f32 %v351, %v351
        %v360 = vmul.f32 %v352, %v352
        %v361 = vmul.f32 %v353, %v353
        %v362 = vmul.f32 %v354, %v358
        %v363 = vmul.f32 %v355, %v359
        %v364 = vmul.f32 %v356, %v360
        %v365 = vmul.f32 %v357, %v361
        %v366 = vmul.f32 %v362, %v339
        %v367 = vmul.f32 %v363, %v341
        %v368 = vmul.f32 %v364, %v343
        %v369 = vmul.f32 %v365, %v345
        %v370 = vld [vmem:[%s220] sm:$0xff]
        %v371 = vld [vmem:[%s220 + $0x8] sm:$0xff]
        %v372 = vld [vmem:[%s220 + $0x10] sm:$0xff]
        %v373 = vld [vmem:[%s220 + $0x18] sm:$0xff]
        %v374 = vsel %vm246, %v366, 0.0
        %v375 = vsel %vm247, %v367, 0.0
        %v376 = vsel %vm248, %v368, 0.0
        %v377 = vsel %vm249, %v369, 0.0
        %v378 = vadd.f32 %v370, %v374
        %v379 = vadd.f32 %v371, %v375
        %v380 = vadd.f32 %v372, %v376
        %v381 = vadd.f32 %v373, %v377
        %382 = vst [vmem:[%s220] sm:$0xff] %v378
        %383 = vst [vmem:[%s220 + $0x8] sm:$0xff] %v379
        %384 = vst [vmem:[%s220 + $0x10] sm:$0xff] %v380
        %385 = vst [vmem:[%s220 + $0x18] sm:$0xff] %v381
        %s386 = sand.u32 %s98, 1
        %s387 = scalar_lea.sflag [#allocation4], %s386
        %s388 = sand.u32 %s98, 1
        %s389 = smul.addr %s388, 32
        %s390 = scalar_lea.vmem [#allocation7], %s389
        // Predicated region
        $region41: #{tpu_custom_call.1} parent=27 // pred_check
          %p391 = pneg %p108
        $region42: #{tpu_custom_call.1} parent=27 // pred_check_branch
          %393 = sbr.rel (%p391) target = $region44
        $region43: #{tpu_custom_call.1} parent=27 // pred_region
          %s394 = smul.u32 4, %s26
          %396 = vsyncadd %s387, 0
          %s397 = smul.addr %s394, 8
          %s398 = scalar_lea.hbm %s2, %s397
          %s399 = sshll.u32 %s390, 4
          %s400 = int_to_ptr.vmem [resolvable:$true] %s399
          %s401 = sshll.u32 %s398, 4
          %s402 = int_to_ptr.hbm [resolvable:$true] %s401
          %407 = dma.vmem_to_hbm [thread:$0]  %s400, 512, %s402, %s387, 128, 128, 8
        $region44: #{tpu_custom_call.1} parent=27 // pred_fallthru
          _
      $region28: #{tpu_custom_call.1} parent=5 // pred_fallthru
        _
      %p408 = scmp.le.s32.totalorder 2, %s17
      // Predicated region
      $region45: #{tpu_custom_call.1} parent=5 // pred_check
        %p409 = pneg %p408
      $region46: #{tpu_custom_call.1} parent=5 // pred_check_branch
        %411 = sbr.rel (%p409) target = $region48
      $region47: #{tpu_custom_call.1} parent=5 // pred_region
        %s412 = ssub.s32 %s17, 2
        // Predicated region
        $region49: #{tpu_custom_call.1} parent=47 // pred_check
          %p413 = pneg %p114
        $region50: #{tpu_custom_call.1} parent=47 // pred_check_branch
          %415 = sbr.rel (%p413) target = $region52
        $region51: #{tpu_custom_call.1} parent=47 // pred_region
          %s416 = sand.u32 %s99, 1
          %s417 = scalar_lea.sflag [#allocation4], %s416
          %s418 = sand.u32 %s99, 1
          %s419 = smul.addr %s418, 32
          %s420 = scalar_lea.vmem [#allocation7], %s419
          %422 = dma.done %s417, 512
        $region52: #{tpu_custom_call.1} parent=47 // pred_fallthru
          _
      $region48: #{tpu_custom_call.1} parent=5 // pred_fallthru
        _
    $region6: #{tpu_custom_call.1} parent=1 // loop_footer
      %s21 = sadd.s32 1, %s17
    $region7: #{tpu_custom_call.1} parent=1 // loop_footer_branch
      %16 = sbr.rel target = $region3
    $region8: #{tpu_custom_call.1} parent=1 // loop_exit
      _
    %423 = vsyncpa [#allocation3], 1
    %s424 = scalar_lea.sflag [#allocation3], 1
    %425 = vsyncpa %s424, 1
    %426 = vsyncpa [#allocation6], 1
    %s427 = scalar_lea.sflag [#allocation6], 1
    %428 = vsyncpa %s427, 1
    %429 = vsyncpa [#allocation4], 1
    %s430 = scalar_lea.sflag [#allocation4], 1
    %431 = vsyncpa %s430, 1

</llo_original>
